<compile_context>
chip_gen: v5e
topology: v5e:2x2
jax: 0.10.0
libtpu: 0.0.40
codegen_flags: <defaults>
</compile_context>

<pallas_src>
import jax
import jax.numpy as jnp
from jax.experimental import pallas as pl
from jax.experimental.pallas import tpu as pltpu

KH = KW = 3            # both convs are 3x3
C0 = 16                # conv0 out channels
C1 = 32                # conv1 out channels
PAD0 = 5               # conv0 padding
RF = KH + KH - 1       # 5: effective receptive field of conv1(conv0(.))
K1 = KH * KW * C0      # 144: fused contraction dim of the two-matmul form
KA = RF * RF + 1       # 26: composed-conv contraction dim (+1 for bias row)


def _fused_conv_kernel(p5_ref, w_ref, o_ref):
    """One batch element; the whole model is one MXU matmul.

    p5_ref : (1, 26, Ppad)  5x5-window im2col of the padded input, last row = 1
    w_ref  : (32, 26)       composed conv weights, last column = composed bias
    o_ref  : (1, 32, Ppad)  output, NCHW-flattened, lane-dense (Ppad last)
    """
    o_ref[0] = jnp.dot(w_ref[...], p5_ref[0],
                       preferred_element_type=jnp.float32)


def prepare_weights(params):
    """Compose conv1 o conv0 into one 5x5 conv + bias.  Call ONCE at init.

    Returns w_aug of shape (32, 26): [:, :25] = W_eff, [:, 25] = b_eff.
    """
    # w0big[(kh*3+kw)*C0 + c, a*5 + b] = w0[a-kh, b-kw, 0, c]  (0 outside 3x3)
    w0_chw = jnp.transpose(params["w0"][:, :, 0, :], (2, 0, 1))   # (16, 3, 3)
    blocks = [
        jnp.pad(w0_chw, ((0, 0), (kh, RF - KH - kh), (kw, RF - KW - kw)))
        .reshape(C0, RF * RF)
        for kh in range(KH) for kw in range(KW)
    ]
    w0big = jnp.concatenate(blocks, axis=0)                       # (144, 25)
    b0rep = jnp.tile(params["b0"], KH * KW).reshape(K1, 1)        # (144, 1)
    w1t = params["w1"].reshape(K1, C1).T                          # (32, 144)

    w_eff = w1t @ w0big                                           # (32, 25)
    b_eff = w1t @ b0rep + params["b1"].reshape(C1, 1)             # (32, 1)
    return jnp.concatenate([w_eff, b_eff], axis=1)                # (32, 26)


def model_forward(x_nchw, w_aug):
    """Matches Model.forward: conv0 (pad=5) -> conv1 (pad=0). Returns NCHW."""
    N, Cin, H, W = x_nchw.shape
    assert Cin == 1
    Ho1 = H + 2 * PAD0 - (RF - 1)                                 # 22
    Wo1 = W + 2 * PAD0 - (RF - 1)                                 # 22
    P = Ho1 * Wo1                                                 # 484
    Ppad = pl.cdiv(P, 128) * 128                                  # 512

    # --- wrapper glue: 5x5 im2col over the zero-padded input ---------------
    xpad = jnp.pad(x_nchw[:, 0], ((0, 0), (PAD0, PAD0), (PAD0, PAD0)))
    cols = [xpad[:, a:a + Ho1, b:b + Wo1].reshape(N, P)
            for a in range(RF) for b in range(RF)]
    p5 = jnp.stack(cols, axis=1)                                  # (N, 25, P)
    p5 = jnp.pad(p5, ((0, 0), (0, 0), (0, Ppad - P)))             # lane-pad
    ones = jnp.ones((N, 1, Ppad), jnp.float32)                    # bias row
    p5 = jnp.concatenate([p5, ones], axis=1)                      # (N, 26, Ppad)

    out = pl.pallas_call(
        _fused_conv_kernel,
        out_shape=jax.ShapeDtypeStruct((N, C1, Ppad), jnp.float32),
        grid=(N,),
        in_specs=[
            pl.BlockSpec((1, KA, Ppad), lambda n: (n, 0, 0)),
            pl.BlockSpec((C1, KA), lambda n: (0, 0)),   # grid-invariant
        ],
        out_specs=pl.BlockSpec((1, C1, Ppad), lambda n: (n, 0, 0)),
        compiler_params=pltpu.CompilerParams(
            dimension_semantics=("parallel",)),
    )(p5, w_aug)

    return out[:, :, :P].reshape(N, C1, Ho1, Wo1)                 # NCHW


def init_params(key):
    k0, k1, k2, k3 = jax.random.split(key, 4)
    # Deterministic synthetic init (HWIO weight layout).
    w0 = jax.random.normal(k0, (3, 3, 1, 16), jnp.float32) * 0.1
    b0 = jax.random.normal(k1, (16,), jnp.float32) * 0.1
    w1 = jax.random.normal(k2, (3, 3, 16, 32), jnp.float32) * 0.1
    b1 = jax.random.normal(k3, (32,), jnp.float32) * 0.1
    return {"w0": w0, "b0": b0, "w1": w1, "b1": b1}


def _reference(x_nchw, params):
    """Pure-JAX reference (lax.conv) for correctness check."""
    x = jnp.transpose(x_nchw, (0, 2, 3, 1))
    dn = ("NHWC", "HWIO", "NHWC")
    h = jax.lax.conv_general_dilated(
        x, params["w0"], (1, 1), [(5, 5), (5, 5)], dimension_numbers=dn
    ) + params["b0"]
    h = jax.lax.conv_general_dilated(
        h, params["w1"], (1, 1), [(0, 0), (0, 0)], dimension_numbers=dn
    ) + params["b1"]
    return jnp.transpose(h, (0, 3, 1, 2))


if __name__ == "__main__":
    key = jax.random.PRNGKey(0)
    kx, kp = jax.random.split(key)
    x = jax.random.normal(kx, (2, 1, 16, 16), jnp.float32)  # NCHW, Cin=1
    params = init_params(kp)

    # Weight composition hoisted out of the per-call path (done once).
    w_aug = jax.block_until_ready(prepare_weights(params))

    fwd = jax.jit(model_forward)
    out = jax.block_until_ready(fwd(x, w_aug))
    assert out.shape == (2, 32, 22, 22), out.shape

    ref = jax.block_until_ready(_reference(x, params))
    assert jnp.allclose(out, ref, rtol=1e-4, atol=1e-4), "mismatch vs reference"

    print("KERNEL_OK")
</pallas_src>

<mosaic_0001>
module attributes {stable_mosaic.version = 11 : i64} {
  func.func @_fused_conv_kernel(%arg0: i32, %arg1: memref<1x26x512xf32, #tpu.memory_space<vmem>>, %arg2: memref<32x26xf32, #tpu.memory_space<vmem>>, %arg3: memref<1x32x512xf32, #tpu.memory_space<vmem>>) attributes {dimension_semantics = [#tpu.dimension_semantics<parallel>], iteration_bounds = array<i64: 2>, scalar_prefetch = 0 : i64, scratch_operands = 0 : i64, tpu.core_type = #tpu.core_type<tc>, window_params = [{transform_indices = @transform_0, window_bounds = array<i64: 1, 26, 512>}, {pipeline_mode = #tpu.pipeline_mode<synchronous>, transform_indices = @transform_1, window_bounds = array<i64: 32, 26>}, {transform_indices = @transform_2, window_bounds = array<i64: 1, 32, 512>}]} {
    %c0 = arith.constant 0 : index
    %c0_0 = arith.constant 0 : index
    %0 = vector.load %arg2[%c0, %c0_0] : memref<32x26xf32, #tpu.memory_space<vmem>>, vector<32x26xf32>
    %c0_1 = arith.constant 0 : index
    %c0_2 = arith.constant 0 : index
    %c0_3 = arith.constant 0 : index
    %1 = vector.load %arg1[%c0_1, %c0_2, %c0_3] : memref<1x26x512xf32, #tpu.memory_space<vmem>>, vector<1x26x512xf32>
    %2 = vector.shape_cast %1 : vector<1x26x512xf32> to vector<26x512xf32>
    %cst = arith.constant dense<0.000000e+00> : vector<32x512xf32>
    %3 = tpu.matmul %0, %2, %cst {dimension_numbers = #tpu.dot_dimension_numbers<[1], [0], [0], [1], [0, 0, 1, 1], [], []>} : vector<32x26xf32>, vector<26x512xf32>, vector<32x512xf32> -> vector<32x512xf32>
    %c0_4 = arith.constant 0 : index
    %c0_5 = arith.constant 0 : index
    %c0_6 = arith.constant 0 : index
    %4 = vector.load %arg3[%c0_4, %c0_5, %c0_6] : memref<1x32x512xf32, #tpu.memory_space<vmem>>, vector<1x32x512xf32>
    %5 = vector.shape_cast %4 : vector<1x32x512xf32> to vector<32x512xf32>
    %6 = vector.shape_cast %3 : vector<32x512xf32> to vector<1x32x512xf32>
    tpu.vector_store %arg3[%c0_4, %c0_5, %c0_6], %6 {strides = array<i32>} : memref<1x32x512xf32, #tpu.memory_space<vmem>>, vector<1x32x512xf32>,
    return
  }
  func.func @transform_0(%arg0: i32) -> (i32, i32, i32) {
    %c0_i32 = arith.constant 0 : i32
    %c0_i32_0 = arith.constant 0 : i32
    %c0_i32_1 = arith.constant 0 : i32
    return %arg0, %c0_i32, %c0_i32_0 : i32, i32, i32
  }
  func.func @transform_1(%arg0: i32) -> (i32, i32) {
    %c0_i32 = arith.constant 0 : i32
    %c0_i32_0 = arith.constant 0 : i32
    %c0_i32_1 = arith.constant 0 : i32
    return %c0_i32, %c0_i32_0 : i32, i32
  }
  func.func @transform_2(%arg0: i32) -> (i32, i32, i32) {
    %c0_i32 = arith.constant 0 : i32
    %c0_i32_0 = arith.constant 0 : i32
    %c0_i32_1 = arith.constant 0 : i32
    return %arg0, %c0_i32, %c0_i32_0 : i32, i32, i32
  }
}

</mosaic_0001>

<llo_original>
// kernel: model_forward.1
$region0: #{model_forward.1}
  #allocation0 [shape = 'u32[]', space=smem, size = 0x4, offset = 0x4, fixed_abs, tag = 'smem constant byte address 0x4 - core index']
  #allocation1 [shape = 'u32[72,128]{1,0:T(1,128)}', space=vmem, size = 0x9000, scoped, tag = 'internal scratch']
  %s0 = inlined_call_operand.vmem [shape: f32[2,26,512], index: 0, kind: input, shape index: {}]
  %s1 = inlined_call_operand.vmem [shape: f32[32,26], index: 1, kind: input, shape index: {}]
  %s2 = inlined_call_operand.vmem [shape: f32[2,32,512], index: 2, kind: output, shape index: {}]
  %s3 = sld [smem:[#allocation0]]
  $region41: #{model_forward.1} parent=0
    _
  %s5 = ssub.s32 1, %s3
  %s6 = scalar_select 0, %s5, %s3
  loop: start=0, step=1, limit=4
  $region2: #{model_forward.1} parent=0 // loop_pre_header
    _
  $region3: #{model_forward.1} parent=0 // loop_header
    %s8 = sphi 0, %s12
    %p9 = scmp.ge.s32.totalorder %s8, 4
    %s18 = sphi 0, %s20
    %s21 = sphi 0, %s18
    %s22 = sphi 0, %s21
    %s38 = sphi 0, %s22
    %s42 = sphi 0, %s42
    %s44 = sphi 0, %s42
    %s45 = sphi 0, %s44
    %s59 = sphi 0, %s45
    %s65 = sphi 0, %s67
    %s68 = sphi 0, %s65
    %s69 = sphi 0, %s68
    %s85 = sphi 0, %s69
  $region4: #{model_forward.1} parent=0 // loop_header_branch
    %11 = sbr.rel (%p9) target = $region8
  $region5: #{model_forward.1} parent=0 // loop_body
    %s13 = ssub.s32 %s8, 1
    %s14 = ssub.s32 %s8, 2
    %s15 = sadd.s32 %s8, 1
    %s16 = ssub.s32 %s8, %s15
    %p17 = scmp.eq.s32.totalorder %s16, 0
    %s19 = sadd.s32 %s18, 1
    %s20 = scalar_select %p17, %s18, %s19
    %p23 = pneg %p17
    %p24 = scmp.eq.s32.totalorder %s8, 1
    %p25 = por %p23, %p24
    %p26 = scmp.ne.s32.totalorder %s18, %s21
    %p27 = scmp.eq.s32.totalorder %s8, 0
    %p28 = por %p26, %p27
    %p29 = scmp.ne.s32.totalorder %s18, %s21
    %p30 = scmp.eq.s32.totalorder %s13, 1
    %p31 = por %p29, %p30
    %p32 = scmp.ne.s32.totalorder %s21, %s22
    %p33 = scmp.eq.s32.totalorder %s13, 0
    %p34 = por %p32, %p33
    %p35 = scmp.ne.s32.totalorder %s21, %s22
    %p36 = scmp.eq.s32.totalorder %s14, 1
    %p37 = por %p35, %p36
    %p39 = scmp.ne.s32.totalorder %s22, %s38
    %p40 = scmp.eq.s32.totalorder %s14, 0
    %p41 = por %p39, %p40
    %s43 = sadd.s32 %s42, 1
    %p46 = scmp.eq.s32.totalorder %s8, 1
    %p47 = scmp.ne.s32.totalorder %s42, %s44
    %p48 = scmp.eq.s32.totalorder %s8, 0
    %p49 = por %p47, %p48
    %p50 = scmp.ne.s32.totalorder %s42, %s44
    %p51 = scmp.eq.s32.totalorder %s13, 1
    %p52 = por %p50, %p51
    %p53 = scmp.ne.s32.totalorder %s44, %s45
    %p54 = scmp.eq.s32.totalorder %s13, 0
    %p55 = por %p53, %p54
    %p56 = scmp.ne.s32.totalorder %s44, %s45
    %p57 = scmp.eq.s32.totalorder %s14, 1
    %p58 = por %p56, %p57
    %p60 = scmp.ne.s32.totalorder %s45, %s59
    %p61 = scmp.eq.s32.totalorder %s14, 0
    %p62 = por %p60, %p61
    %s63 = ssub.s32 %s8, %s15
    %p64 = scmp.eq.s32.totalorder %s63, 0
    %s66 = sadd.s32 %s65, 1
    %s67 = scalar_select %p64, %s65, %s66
    %p70 = pneg %p64
    %p71 = scmp.eq.s32.totalorder %s8, 1
    %p72 = por %p70, %p71
    %p73 = scmp.ne.s32.totalorder %s65, %s68
    %p74 = scmp.eq.s32.totalorder %s8, 0
    %p75 = por %p73, %p74
    %p76 = scmp.ne.s32.totalorder %s65, %s68
    %p77 = scmp.eq.s32.totalorder %s13, 1
    %p78 = por %p76, %p77
    %p79 = scmp.ne.s32.totalorder %s68, %s69
    %p80 = scmp.eq.s32.totalorder %s13, 0
    %p81 = por %p79, %p80
    %p82 = scmp.ne.s32.totalorder %s68, %s69
    %p83 = scmp.eq.s32.totalorder %s14, 1
    %p84 = por %p82, %p83
    %p86 = scmp.ne.s32.totalorder %s69, %s85
    %p87 = scmp.eq.s32.totalorder %s14, 0
    %p88 = por %p86, %p87
    %p89 = scmp.le.s32.totalorder 1, %s8
    %p90 = scmp.lt.s32.totalorder %s8, 3
    %p91 = pnand %p89, %p90
    %p92 = pneg %p91
    // Predicated region
    $region9: #{model_forward.1} parent=5 // pred_check
      _
    $region10: #{model_forward.1} parent=5 // pred_check_branch
      %94 = sbr.rel (%p91) target = $region12
    $region11: #{model_forward.1} parent=5 // pred_region
      %s95 = ssub.s32 %s8, 1
      // Predicated region
      $region13: #{model_forward.1} parent=11 // pred_check
        %p96 = pneg %p55
      $region14: #{model_forward.1} parent=11 // pred_check_branch
        %98 = sbr.rel (%p96) target = $region16
      $region15: #{model_forward.1} parent=11 // pred_region
        _
      $region16: #{model_forward.1} parent=11 // pred_fallthru
        _
    $region12: #{model_forward.1} parent=5 // pred_fallthru
      _
    %p99 = scmp.lt.s32.totalorder %s8, 2
    // Predicated region
    $region17: #{model_forward.1} parent=5 // pred_check
      %p100 = pneg %p99
    $region18: #{model_forward.1} parent=5 // pred_check_branch
      %102 = sbr.rel (%p100) target = $region20
    $region19: #{model_forward.1} parent=5 // pred_region
      // Predicated region
      $region21: #{model_forward.1} parent=19 // pred_check
        %p103 = pneg %p28
      $region22: #{model_forward.1} parent=19 // pred_check_branch
        %105 = sbr.rel (%p103) target = $region24
      $region23: #{model_forward.1} parent=19 // pred_region
        %p106 = scmp.lt.s32.totalorder %s8, 1
        %s107 = scalar_select %p106, %s8, 1
        %s108 = smul.addr %s107, 16
        %s109 = smul.addr %s108, 8
        %s110 = scalar_lea.vmem %s0, %s109
      $region24: #{model_forward.1} parent=19 // pred_fallthru
        _
    $region20: #{model_forward.1} parent=5 // pred_fallthru
      _
    %p111 = scmp.le.s32.totalorder 1, %s8
    %p112 = scmp.lt.s32.totalorder %s8, 3
    %p113 = pnand %p111, %p112
    %p114 = pneg %p113
    // Predicated region
    $region25: #{model_forward.1} parent=5 // pred_check
      _
    $region26: #{model_forward.1} parent=5 // pred_check_branch
      %116 = sbr.rel (%p113) target = $region28
    $region27: #{model_forward.1} parent=5 // pred_region
      %s117 = ssub.s32 %s8, 1
      %p118 = scmp.lt.s32.totalorder %s13, 1
      %s119 = scalar_select %p118, %s13, 1
      %s120 = smul.addr %s119, 16
      %s121 = smul.addr %s120, 8
      %s122 = scalar_lea.vmem %s0, %s121
      %p123 = pneg %p34
      %p124 = pneg %p31
      %p125 = pneg %p55
      %p126 = pneg %p52
      %p127 = pneg %p81
      %p128 = pneg %p78
      %p129 = scmp.lt.s32.totalorder %s13, 1
      %s130 = scalar_select %p129, %s13, 1
      %s131 = smul.addr %s130, 16
      %s132 = smul.addr %s131, 8
      %s133 = scalar_lea.vmem %s2, %s132
      %p134 = scmp.lt.s32.totalorder %s13, 1
      %s135 = scalar_select %p134, %s13, 1
      %s136 = smul.addr %s135, 16
      %s137 = smul.addr %s136, 8
      %s138 = scalar_lea.vmem %s0, %s137
      %p139 = scmp.lt.s32.totalorder %s13, 1
      %s140 = scalar_select %p139, %s13, 1
      %s141 = smul.addr %s140, 16
      %s142 = smul.addr %s141, 8
      %s143 = scalar_lea.vmem %s2, %s142
      %v144 = vld [vmem:[%s1] sm:$0xff]
      %v145 = vld [vmem:[%s1 + $0x8] sm:$0xff]
      %v146 = vld [vmem:[%s1 + $0x10] sm:$0xff]
      %v147 = vld [vmem:[%s1 + $0x18] sm:$0xff]
      %v148 = vld [vmem:[%s138] sm:$0xff]
      %v149 = vld [vmem:[%s138 + $0x8] sm:$0xff]
      %v150 = vld [vmem:[%s138 + $0x10] sm:$0xff]
      %v151 = vld [vmem:[%s138 + $0x18] sm:$0xff]
      %v152 = vld [vmem:[%s138 + $0x20] sm:$0xff]
      %v153 = vld [vmem:[%s138 + $0x28] sm:$0xff]
      %v154 = vld [vmem:[%s138 + $0x30] sm:$0xff]
      %v155 = vld [vmem:[%s138 + $0x38] sm:$0xff]
      %v156 = vld [vmem:[%s138 + $0x40] sm:$0xff]
      %v157 = vld [vmem:[%s138 + $0x48] sm:$0xff]
      %v158 = vld [vmem:[%s138 + $0x50] sm:$0xff]
      %v159 = vld [vmem:[%s138 + $0x58] sm:$0xff]
      %v160 = vld [vmem:[%s138 + $0x60] sm:$0x3]
      %v161 = vld [vmem:[%s138 + $0x68] sm:$0x3]
      %v162 = vld [vmem:[%s138 + $0x70] sm:$0x3]
      %v163 = vld [vmem:[%s138 + $0x78] sm:$0x3]
      %vm164 = vcmask 211968
      %v166 = vsel %vm164, %v144, 0
      %v169 = vsel %vm164, %v145, 0
      %v172 = vsel %vm164, %v146, 0
      %v175 = vsel %vm164, %v147, 0
      %vm177 = vcmask 1041408
      %v179 = vsel %vm177, %v160, 0
      %v182 = vsel %vm177, %v161, 0
      %v185 = vsel %vm177, %v162, 0
      %v188 = vsel %vm177, %v163, 0
      %190 = vmatpush.msra.mxu0 0.0
      %191 = vmatpush.msra.mxu0 0.0
      %192 = vmatpush.msra.mxu0 0.0
      %193 = vmatpush.msra.mxu0 0.0
      %194 = vmatpush.msra.mxu0 0.0
      %195 = vmatpush.msra.mxu0 0.0
      %196 = vmatpush.msra.mxu0 0.0
      %197 = vmatpush.msra.mxu0 0.0
      %198 = vmatpush.msra.mxu0 0.0
      %199 = vmatpush.msra.mxu0 0.0
      %200 = vmatpush.msra.mxu0 0.0
      %201 = vmatpush.msra.mxu0 0.0
      %202 = vmatpush.msra.mxu0 %v179
      %203 = vmatpush.msra.mxu0 %v156
      %204 = vmatpush.msra.mxu0 %v152
      %205 = vmatpush.msra.mxu0 %v148
      %206 = vmatmul.f32.gmra.mxu0 %v166
      %v207 = vpop.f32.mrf.mxu0
      %v208 = vadd.f32 0.0, %v207
      %209 = vmatmul.f32.gmra.mxu0 %v169
      %v210 = vpop.f32.mrf.mxu0
      %v211 = vadd.f32 0.0, %v210
      %212 = vmatmul.f32.gmra.mxu0 %v172
      %v213 = vpop.f32.mrf.mxu0
      %v214 = vadd.f32 0.0, %v213
      %215 = vmatmul.f32.gmra.mxu0 %v175
      %v216 = vpop.f32.mrf.mxu0
      %v217 = vadd.f32 0.0, %v216
      %218 = vdwg.mxu0
      %219 = vmatpush.msra.mxu0 0.0
      %220 = vmatpush.msra.mxu0 0.0
      %221 = vmatpush.msra.mxu0 0.0
      %222 = vmatpush.msra.mxu0 0.0
      %223 = vmatpush.msra.mxu0 0.0
      %224 = vmatpush.msra.mxu0 0.0
      %225 = vmatpush.msra.mxu0 0.0
      %226 = vmatpush.msra.mxu0 0.0
      %227 = vmatpush.msra.mxu0 0.0
      %228 = vmatpush.msra.mxu0 0.0
      %229 = vmatpush.msra.mxu0 0.0
      %230 = vmatpush.msra.mxu0 0.0
      %231 = vmatpush.msra.mxu0 %v182
      %232 = vmatpush.msra.mxu0 %v157
      %233 = vmatpush.msra.mxu0 %v153
      %234 = vmatpush.msra.mxu0 %v149
      %235 = vmatmul.f32.gmra.mxu0 %v166
      %v236 = vpop.f32.mrf.mxu0
      %v237 = vadd.f32 0.0, %v236
      %238 = vmatmul.f32.gmra.mxu0 %v169
      %v239 = vpop.f32.mrf.mxu0
      %v240 = vadd.f32 0.0, %v239
      %241 = vmatmul.f32.gmra.mxu0 %v172
      %v242 = vpop.f32.mrf.mxu0
      %v243 = vadd.f32 0.0, %v242
      %244 = vmatmul.f32.gmra.mxu0 %v175
      %v245 = vpop.f32.mrf.mxu0
      %v246 = vadd.f32 0.0, %v245
      %247 = vdwg.mxu0
      %248 = vmatpush.msra.mxu0 0.0
      %249 = vmatpush.msra.mxu0 0.0
      %250 = vmatpush.msra.mxu0 0.0
      %251 = vmatpush.msra.mxu0 0.0
      %252 = vmatpush.msra.mxu0 0.0
      %253 = vmatpush.msra.mxu0 0.0
      %254 = vmatpush.msra.mxu0 0.0
      %255 = vmatpush.msra.mxu0 0.0
      %256 = vmatpush.msra.mxu0 0.0
      %257 = vmatpush.msra.mxu0 0.0
      %258 = vmatpush.msra.mxu0 0.0
      %259 = vmatpush.msra.mxu0 0.0
      %260 = vmatpush.msra.mxu0 %v185
      %261 = vmatpush.msra.mxu0 %v158
      %262 = vmatpush.msra.mxu0 %v154
      %263 = vmatpush.msra.mxu0 %v150
      %264 = vmatmul.f32.gmra.mxu0 %v166
      %v265 = vpop.f32.mrf.mxu0
      %v266 = vadd.f32 0.0, %v265
      %267 = vmatmul.f32.gmra.mxu0 %v169
      %v268 = vpop.f32.mrf.mxu0
      %v269 = vadd.f32 0.0, %v268
      %270 = vmatmul.f32.gmra.mxu0 %v172
      %v271 = vpop.f32.mrf.mxu0
      %v272 = vadd.f32 0.0, %v271
      %273 = vmatmul.f32.gmra.mxu0 %v175
      %v274 = vpop.f32.mrf.mxu0
      %v275 = vadd.f32 0.0, %v274
      %276 = vdwg.mxu0
      %277 = vmatpush.msra.mxu0 0.0
      %278 = vmatpush.msra.mxu0 0.0
      %279 = vmatpush.msra.mxu0 0.0
      %280 = vmatpush.msra.mxu0 0.0
      %281 = vmatpush.msra.mxu0 0.0
      %282 = vmatpush.msra.mxu0 0.0
      %283 = vmatpush.msra.mxu0 0.0
      %284 = vmatpush.msra.mxu0 0.0
      %285 = vmatpush.msra.mxu0 0.0
      %286 = vmatpush.msra.mxu0 0.0
      %287 = vmatpush.msra.mxu0 0.0
      %288 = vmatpush.msra.mxu0 0.0
      %289 = vmatpush.msra.mxu0 %v188
      %290 = vmatpush.msra.mxu0 %v159
      %291 = vmatpush.msra.mxu0 %v155
      %292 = vmatpush.msra.mxu0 %v151
      %293 = vmatmul.f32.gmra.mxu0 %v166
      %v294 = vpop.f32.mrf.mxu0
      %v295 = vadd.f32 0.0, %v294
      %296 = vmatmul.f32.gmra.mxu0 %v169
      %v297 = vpop.f32.mrf.mxu0
      %v298 = vadd.f32 0.0, %v297
      %299 = vmatmul.f32.gmra.mxu0 %v172
      %v300 = vpop.f32.mrf.mxu0
      %v301 = vadd.f32 0.0, %v300
      %302 = vmatmul.f32.gmra.mxu0 %v175
      %v303 = vpop.f32.mrf.mxu0
      %v304 = vadd.f32 0.0, %v303
      %305 = vdwg.mxu0
      %306 = vst [vmem:[%s143] sm:$0xff] %v208
      %307 = vst [vmem:[%s143 + $0x8] sm:$0xff] %v237
      %308 = vst [vmem:[%s143 + $0x10] sm:$0xff] %v266
      %309 = vst [vmem:[%s143 + $0x18] sm:$0xff] %v295
      %310 = vst [vmem:[%s143 + $0x20] sm:$0xff] %v211
      %311 = vst [vmem:[%s143 + $0x28] sm:$0xff] %v240
      %312 = vst [vmem:[%s143 + $0x30] sm:$0xff] %v269
      %313 = vst [vmem:[%s143 + $0x38] sm:$0xff] %v298
      %314 = vst [vmem:[%s143 + $0x40] sm:$0xff] %v214
      %315 = vst [vmem:[%s143 + $0x48] sm:$0xff] %v243
      %316 = vst [vmem:[%s143 + $0x50] sm:$0xff] %v272
      %317 = vst [vmem:[%s143 + $0x58] sm:$0xff] %v301
      %318 = vst [vmem:[%s143 + $0x60] sm:$0xff] %v217
      %319 = vst [vmem:[%s143 + $0x68] sm:$0xff] %v246
      %320 = vst [vmem:[%s143 + $0x70] sm:$0xff] %v275
      %321 = vst [vmem:[%s143 + $0x78] sm:$0xff] %v304
      %p322 = scmp.lt.s32.totalorder %s13, 1
      %s323 = scalar_select %p322, %s13, 1
      %s324 = smul.addr %s323, 16
      %s325 = smul.addr %s324, 8
      %s326 = scalar_lea.vmem %s2, %s325
      // Predicated region
      $region29: #{model_forward.1} parent=27 // pred_check
        %p327 = pneg %p78
      $region30: #{model_forward.1} parent=27 // pred_check_branch
        %329 = sbr.rel (%p327) target = $region32
      $region31: #{model_forward.1} parent=27 // pred_region
        _
      $region32: #{model_forward.1} parent=27 // pred_fallthru
        _
    $region28: #{model_forward.1} parent=5 // pred_fallthru
      _
    %p330 = scmp.le.s32.totalorder 2, %s8
    // Predicated region
    $region33: #{model_forward.1} parent=5 // pred_check
      %p331 = pneg %p330
    $region34: #{model_forward.1} parent=5 // pred_check_branch
      %333 = sbr.rel (%p331) target = $region36
    $region35: #{model_forward.1} parent=5 // pred_region
      %s334 = ssub.s32 %s8, 2
      // Predicated region
      $region37: #{model_forward.1} parent=35 // pred_check
        %p335 = pneg %p84
      $region38: #{model_forward.1} parent=35 // pred_check_branch
        %337 = sbr.rel (%p335) target = $region40
      $region39: #{model_forward.1} parent=35 // pred_region
        %p338 = scmp.lt.s32.totalorder %s14, 1
        %s339 = scalar_select %p338, %s14, 1
        %s340 = smul.addr %s339, 16
        %s341 = smul.addr %s340, 8
        %s342 = scalar_lea.vmem %s2, %s341
      $region40: #{model_forward.1} parent=35 // pred_fallthru
        _
    $region36: #{model_forward.1} parent=5 // pred_fallthru
      _
  $region6: #{model_forward.1} parent=0 // loop_footer
    %s12 = sadd.s32 1, %s8
  $region7: #{model_forward.1} parent=0 // loop_footer_branch
    %7 = sbr.rel target = $region3
  $region8: #{model_forward.1} parent=0 // loop_exit
    _

</llo_original>
